<compile_context>
chip_gen: v6e
topology: v6e:2x2x1
jax: 0.10.0
libtpu: 0.0.40
codegen_flags: <defaults>
</compile_context>

<pallas_src>
import functools

import numpy as np
import jax
import jax.numpy as jnp
from jax import lax
from jax.experimental import pallas as pl
from jax.experimental.pallas import tpu as pltpu

EPS = 1e-12          # torch.nn.functional.normalize eps
NEG_INF = -1e30      # mask value for padded pool columns


def _round_up(x, m):
    return ((x + m - 1) // m) * m


def dual_eprompt_kernel(x_ref, nk_ref, p_ref, out_ref, *, pool_real):
    """Per (e-layer, batch-tile) grid point:
         q       = normalize(x, dim=1)
         cos_sim = q @ n_K^T                 (n_K pre-normalized outside the kernel)
         k_idx   = argmax_k cos_sim          (top_k = 1, first max on ties)
         P_      = p[k_idx] == one_hot(k_idx) @ p_flat   (row gather on the MXU)
    """
    x = x_ref[...]                                              # [TB, Dk] f32
    nK = nk_ref[...]                                            # [Kp, Dk] f32

    # normalize(x, dim=1): x / max(||x||, eps)  ==  x * rsqrt(max(sumsq, eps^2))
    sumsq = jnp.sum(x * x, axis=1, keepdims=True)               # [TB, 1]
    q = x * lax.rsqrt(jnp.maximum(sumsq, jnp.float32(EPS * EPS)))

    # cos_sim = q @ n_K^T, contracting last dims (no materialized transpose)
    cos = lax.dot_general(q, nK, (((1,), (1,)), ((), ())),
                          preferred_element_type=jnp.float32)   # [TB, Kp]

    col = lax.broadcasted_iota(jnp.int32, cos.shape, 1)         # [TB, Kp]
    if pool_real < cos.shape[1]:
        # padded key rows must never win the argmax
        cos = jnp.where(col < pool_real, cos, jnp.float32(NEG_INF))

    # top-1 selection (first index on ties, like torch.topk k=1 / argmax)
    m = jnp.max(cos, axis=1, keepdims=True)                     # [TB, 1]
    idx = jnp.min(jnp.where(cos >= m, col, jnp.int32(2 ** 30)),
                  axis=1, keepdims=True)                        # [TB, 1]
    one_hot = jnp.where(col == idx, 1.0, 0.0).astype(p_ref.dtype)   # [TB, Kp]

    # P_flat = one_hot @ p_flat  (MXU, f32 accumulation, cast fused into the store)
    out_ref[...] = jnp.dot(one_hot, p_ref[...],
                           preferred_element_type=jnp.float32
                           ).astype(out_ref.dtype)


def _choose_tb(Bp, Dk, LD, Kp, p_bytes, out_bytes, max_tb=256,
               vmem_budget=32 * 1024 * 1024):
    """Pick a batch tile that divides Bp, fits the VMEM budget, and (when the batch is
    large enough) gives an even number >= 4 of batch grid steps for pipelining and
    v7x megacore sharding."""
    def est(tb):
        return (2 * tb * Dk * 4            # x, double-buffered
                + 1 * Kp * Dk * 4          # n_K, single-buffered (pl.Buffered(1))
                + 2 * Kp * LD * p_bytes    # p_flat, double-buffered
                + 2 * tb * LD * out_bytes  # output, double-buffered
                + tb * LD * 4              # f32 matmul epilogue temp
                + tb * Kp * 8)             # cos / one-hot temps
    cands = [tb for tb in range(8, min(max_tb, Bp) + 1, 8)
             if Bp % tb == 0 and est(tb) <= vmem_budget]
    if not cands:
        # TODO(synk): if even TB=8 overflows the budget (very large e_p_length*emb_d),
        # add a second grid axis tiling LD in multiples of 128 instead.
        cands = [8]
    good = [tb for tb in cands if (Bp // tb) >= 4 and (Bp // tb) % 2 == 0]
    tb = max(good) if good else max(cands)
    return tb, est(tb)


def dual_eprompt_forward(x_querry, n_k_stack, p_flat_stack, *,
                         pool_real, p_length, emb_d, out_dtype=jnp.bfloat16):
    """x_querry:     [B, Dk]     f32
       n_k_stack:    [E, Kp, Dk] f32  (row-normalized keys, pool padded to Kp)
       p_flat_stack: [E, Kp, LD]      (flattened prompt pools, pool padded to Kp)
       Returns P_ = p[top1(cos_sim)] for every e-layer as [E, B, L, De] in out_dtype."""
    B, Dk = x_querry.shape
    E, Kp, LD = p_flat_stack.shape

    Bp = _round_up(B, 8)
    xq = x_querry if Bp == B else jnp.pad(x_querry, ((0, Bp - B), (0, 0)))

    p_bytes = np.dtype(p_flat_stack.dtype).itemsize
    out_bytes = np.dtype(out_dtype).itemsize
    TB, est = _choose_tb(Bp, Dk, LD, Kp, p_bytes, out_bytes)
    vmem_limit = int(min(max(est + 8 * 1024 * 1024, 16 * 1024 * 1024),
                         48 * 1024 * 1024))      # stays well under v7x's 64 MiB

    out = pl.pallas_call(
        functools.partial(dual_eprompt_kernel, pool_real=pool_real),
        out_shape=jax.ShapeDtypeStruct((E, Bp, LD), out_dtype),
        # Layer axis OUTER so n_K / p_flat are fetched once per layer; batch axis INNER
        # so x / output tiles pipeline and the "parallel" axis can shard across cores.
        grid=(E, Bp // TB),
        in_specs=[
            pl.BlockSpec((TB, Dk), lambda e, i: (i, 0)),            # x tile (pipelined)
            pl.BlockSpec((None, Kp, Dk), lambda e, i: (e, 0, 0),    # n_K: resident,
                         pipeline_mode=pl.Buffered(1)),             #   single-buffered
            pl.BlockSpec((None, Kp, LD), lambda e, i: (e, 0, 0)),   # p_flat: resident,
        ],                                                          #   2-buf hides layer switch
        out_specs=pl.BlockSpec((None, TB, LD), lambda e, i: (e, i, 0)),  # lane-dense bf16 out
        compiler_params=pltpu.CompilerParams(
            dimension_semantics=("arbitrary", "parallel"),
            vmem_limit_bytes=vmem_limit,
        ),
    )(xq, n_k_stack, p_flat_stack)

    if Bp != B:            # only when B is not a multiple of 8 (tiny ragged batches)
        out = out[:, :B]
    return out.reshape(E, B, p_length, emb_d)


class DualPromptJax:
    """JAX/Pallas port of models/zoo.py::DualPrompt (inference forward path)."""

    def __init__(self, emb_d, n_tasks, prompt_param, key_dim=768, seed=0,
                 p_dtype=jnp.bfloat16, out_dtype=jnp.bfloat16):
        # Pass p_dtype=out_dtype=jnp.float32 for bit-level parity with the torch params
        # (bf16 defaults trade ~0.4% quantization for ~2x less HBM output traffic).
        self.task_count = 0
        self.emb_d = emb_d
        self.key_d = key_dim
        self.n_tasks = n_tasks
        self.top_k = 1
        self.task_id_bootstrap = True
        self.g_layers = [0, 1]
        self.e_layers = [2, 3, 4]
        self.e_pool_size = int(prompt_param[0])
        self.e_p_length = int(prompt_param[1])
        self.g_p_length = int(prompt_param[2])
        self.out_dtype = out_dtype

        rng = np.random.RandomState(seed)
        self.params = {}     # original f32 parameters (torch-equivalent)

        pool_pad = _round_up(self.e_pool_size, 128)   # lane-dense pool axis
        self._pool_pad = pool_pad

        for g in self.g_layers:
            self.params[f"g_p_{g}"] = jnp.asarray(
                rng.rand(self.g_p_length, emb_d).astype(np.float32))

        # Hoisted constant work (done ONCE): normalize keys, flatten pools, pad pool
        # dim to 128, and stack the e-layers on a leading axis for one fused kernel.
        nE = len(self.e_layers)
        LD = self.e_p_length * emb_d
        nk_stack = np.zeros((nE, pool_pad, self.key_d), np.float32)
        pf_stack = np.zeros((nE, pool_pad, LD), np.float32)
        for li, e in enumerate(self.e_layers):
            p = rng.rand(self.e_pool_size, self.e_p_length, emb_d).astype(np.float32)
            k = rng.rand(self.e_pool_size, self.key_d).astype(np.float32)
            self.params[f"e_p_{e}"] = jnp.asarray(p)
            self.params[f"e_k_{e}"] = jnp.asarray(k)
            nk_stack[li, : self.e_pool_size] = (
                k / np.maximum(np.linalg.norm(k, axis=1, keepdims=True), EPS))
            pf_stack[li, : self.e_pool_size] = p.reshape(self.e_pool_size, -1)

        self._e_nk = jnp.asarray(nk_stack)                       # [E, Kp, key_d] f32
        self._e_pflat = jnp.asarray(pf_stack).astype(p_dtype)    # [E, Kp, L*De]
        self._e_layer_index = {e: li for li, e in enumerate(self.e_layers)}
        self._e_cache = None   # (x_querry object, [E, B, L, De] gathered prompts)

    def process_task_count(self):
        self.task_count += 1

    def _all_e_prompts(self, x_querry):
        # All e-layers see the same query in DualPrompt -> compute all of them in one
        # fused pallas_call and cache by query identity; layers 3/4 reuse the launch.
        if self._e_cache is None or self._e_cache[0] is not x_querry:
            pe = dual_eprompt_forward(
                x_querry, self._e_nk, self._e_pflat,
                pool_real=self.e_pool_size, p_length=self.e_p_length,
                emb_d=self.emb_d, out_dtype=self.out_dtype)       # [E, B, L, De]
            self._e_cache = (x_querry, pe)
        return self._e_cache[1]

    def forward(self, x_querry, l, x_block, train=False, task_id=None):
        B = x_querry.shape[0]
        e_valid = l in self.e_layers
        g_valid = l in self.g_layers
        # TODO(synk): training branches (task_id_bootstrap loss / top-k loss) are not
        # reproduced; this port implements the inference (eval) selection path, loss=0.
        loss = 0

        Ek = Ev = Gk = Gv = None
        if e_valid:
            P_ = self._all_e_prompts(x_querry)[self._e_layer_index[l]]   # [B, L, De]
            i = self.e_p_length // 2
            Ek = P_[:, :i, :].reshape(B, -1, self.emb_d)
            Ev = P_[:, i:, :].reshape(B, -1, self.emb_d)

        if g_valid:
            # pure parameter broadcast — no compute, done in plain JAX
            j = self.g_p_length // 2
            gp = self.params[f"g_p_{l}"]
            P_ = jnp.broadcast_to(gp[None, :, :], (B,) + gp.shape)
            Gk = P_[:, :j, :]
            Gv = P_[:, j:, :]

        if e_valid and g_valid:
            p_return = [jnp.concatenate((Ek, Gk), axis=1),
                        jnp.concatenate((Ev, Gv), axis=1)]
        elif e_valid:
            p_return = [Ek, Ev]
        elif g_valid:
            p_return = [Gk, Gv]
        else:
            p_return = None
        return p_return, loss, x_block


if __name__ == "__main__":
    # small shapes consistent with the module
    emb_d, key_dim = 32, 32
    n_tasks = 2
    # prompt_param = [e_pool_size, e_p_length, g_p_length]
    prompt_param = [10, 8, 6]
    B = 2

    model = DualPromptJax(emb_d, n_tasks, prompt_param, key_dim, seed=0)

    key = jax.random.PRNGKey(0)
    kx, kb = jax.random.split(key)
    x_querry = jax.random.normal(kx, (B, key_dim), jnp.float32)
    x_block = jax.random.normal(kb, (B, 8, emb_d), jnp.float32)   # passthrough

    # ---- e-layers (fused Pallas kernel path, exercises the per-layer indexing) ----
    i = model.e_p_length // 2
    q = x_querry / jnp.maximum(jnp.linalg.norm(x_querry, axis=1, keepdims=True), EPS)
    for l in model.e_layers:
        (Ek, Ev), loss, xb = model.forward(x_querry, l=l, x_block=x_block, train=False)
        jax.block_until_ready((Ek, Ev))

        # pure-jnp reference of the torch forward math (f32 params)
        K = model.params[f"e_k_{l}"]
        p = model.params[f"e_p_{l}"]
        n_K = K / jnp.maximum(jnp.linalg.norm(K, axis=1, keepdims=True), EPS)
        cos_sim = q @ n_K.T
        k_idx = jnp.argmax(cos_sim, axis=1)          # top_k = 1
        P_ref = p[k_idx]                             # [B, L, emb_d]
        Ek_np = np.asarray(Ek.astype(jnp.float32))
        Ev_np = np.asarray(Ev.astype(jnp.float32))
        assert np.allclose(Ek_np, np.asarray(P_ref[:, :i, :]), rtol=2e-2, atol=2e-3)
        assert np.allclose(Ev_np, np.asarray(P_ref[:, i:, :]), rtol=2e-2, atol=2e-3)
        assert np.allclose(np.asarray(xb), np.asarray(x_block))

    # ---- g-layer (pure broadcast path) ----
    (Gk, Gv), _, _ = model.forward(x_querry, l=0, x_block=x_block, train=False)
    jax.block_until_ready((Gk, Gv))
    gp = model.params["g_p_0"]
    j = model.g_p_length // 2
    assert np.allclose(np.asarray(Gk),
                       np.asarray(jnp.broadcast_to(gp[None, :j, :], (B, j, emb_d))))
    assert np.allclose(np.asarray(Gv),
                       np.asarray(jnp.broadcast_to(gp[None, j:, :],
                                                   (B, model.g_p_length - j, emb_d))))

    # ---- layer outside both sets ----
    none_ret, _, _ = model.forward(x_querry, l=7, x_block=x_block)
    assert none_ret is None

    print("KERNEL_OK")
</pallas_src>

<mosaic_0001>
module attributes {stable_mosaic.version = 11 : i64} {
  func.func @dual_eprompt_kernel(%arg0: i32, %arg1: i32, %arg2: memref<8x32xf32, #tpu.memory_space<vmem>>, %arg3: memref<1x128x32xf32, #tpu.memory_space<vmem>>, %arg4: memref<1x128x256xbf16, #tpu.memory_space<vmem>>, %arg5: memref<1x8x256xbf16, #tpu.memory_space<vmem>>) attributes {dimension_semantics = [#tpu.dimension_semantics<arbitrary>, #tpu.dimension_semantics<parallel>], iteration_bounds = array<i64: 3, 1>, scalar_prefetch = 0 : i64, scratch_operands = 0 : i64, tpu.core_type = #tpu.core_type<tc>, window_params = [{transform_indices = @transform_0, window_bounds = array<i64: 8, 32>}, {pipeline_mode = #tpu.pipeline_mode<synchronous>, transform_indices = @transform_1, window_bounds = array<i64: 1, 128, 32>}, {transform_indices = @transform_2, window_bounds = array<i64: 1, 128, 256>}, {transform_indices = @transform_3, window_bounds = array<i64: 1, 8, 256>}]} {
    %c0 = arith.constant 0 : index
    %c0_0 = arith.constant 0 : index
    %0 = vector.load %arg2[%c0, %c0_0] : memref<8x32xf32, #tpu.memory_space<vmem>>, vector<8x32xf32>
    %c0_1 = arith.constant 0 : index
    %c0_2 = arith.constant 0 : index
    %c0_3 = arith.constant 0 : index
    %1 = vector.load %arg3[%c0_1, %c0_2, %c0_3] : memref<1x128x32xf32, #tpu.memory_space<vmem>>, vector<1x128x32xf32>
    %2 = vector.shape_cast %1 : vector<1x128x32xf32> to vector<128x32xf32>
    %3 = arith.mulf %0, %0 : vector<8x32xf32>
    %cst = arith.constant dense<0.000000e+00> : vector<8xf32>
    %4 = vector.multi_reduction <add>, %3, %cst [1] : vector<8x32xf32> to vector<8xf32>
    %5 = vector.shape_cast %4 : vector<8xf32> to vector<8x1xf32>
    %cst_4 = arith.constant 1.000000e-24 : f32
    %6 = vector.broadcast %cst_4 : f32 to vector<8x1xf32>
    %7 = arith.maximumf %5, %6 : vector<8x1xf32>
    %8 = math.rsqrt %7 : vector<8x1xf32>
    %9 = vector.broadcast %8 : vector<8x1xf32> to vector<8x32xf32>
    %10 = arith.mulf %0, %9 : vector<8x32xf32>
    %cst_5 = arith.constant dense<0.000000e+00> : vector<8x128xf32>
    %11 = tpu.matmul %10, %2, %cst_5 {dimension_numbers = #tpu.dot_dimension_numbers<[1], [1], [0], [0], [0, 0, 1, 0], [], []>} : vector<8x32xf32>, vector<128x32xf32>, vector<8x128xf32> -> vector<8x128xf32>
    %12 = tpu.iota {dimensions = array<i32: 1>} : vector<8x128xi32>
    %c10_i32 = arith.constant 10 : i32
    %13 = vector.broadcast %c10_i32 : i32 to vector<8x128xi32>
    %14 = arith.cmpi slt, %12, %13 : vector<8x128xi32>
    %cst_6 = arith.constant -1.000000e+30 : f32
    %15 = vector.broadcast %cst_6 : f32 to vector<8x128xf32>
    %16 = arith.select %14, %11, %15 : vector<8x128xi1>, vector<8x128xf32>
    %cst_7 = arith.constant dense<0xFF800000> : vector<8xf32>
    %17 = vector.multi_reduction <maximumf>, %16, %cst_7 [1] : vector<8x128xf32> to vector<8xf32>
    %18 = vector.shape_cast %17 : vector<8xf32> to vector<8x1xf32>
    %19 = vector.broadcast %18 : vector<8x1xf32> to vector<8x128xf32>
    %20 = arith.cmpf oge, %16, %19 : vector<8x128xf32>
    %c1073741824_i32 = arith.constant 1073741824 : i32
    %21 = vector.broadcast %c1073741824_i32 : i32 to vector<8x128xi32>
    %22 = arith.select %20, %12, %21 : vector<8x128xi1>, vector<8x128xi32>
    %cst_8 = arith.constant dense<2147483647> : vector<8xi32>
    %23 = vector.multi_reduction <minsi>, %22, %cst_8 [1] : vector<8x128xi32> to vector<8xi32>
    %24 = vector.shape_cast %23 : vector<8xi32> to vector<8x1xi32>
    %25 = vector.broadcast %24 : vector<8x1xi32> to vector<8x128xi32>
    %26 = arith.cmpi eq, %12, %25 : vector<8x128xi32>
    %cst_9 = arith.constant 1.000000e+00 : f32
    %cst_10 = arith.constant 0.000000e+00 : f32
    %27 = vector.broadcast %cst_9 : f32 to vector<8x128xf32>
    %28 = vector.broadcast %cst_10 : f32 to vector<8x128xf32>
    %29 = arith.select %26, %27, %28 : vector<8x128xi1>, vector<8x128xf32>
    %30 = arith.truncf %29 : vector<8x128xf32> to vector<8x128xbf16>
    %c0_11 = arith.constant 0 : index
    %c0_12 = arith.constant 0 : index
    %c0_13 = arith.constant 0 : index
    %31 = vector.load %arg4[%c0_11, %c0_12, %c0_13] : memref<1x128x256xbf16, #tpu.memory_space<vmem>>, vector<1x128x256xbf16>
    %32 = vector.shape_cast %31 : vector<1x128x256xbf16> to vector<128x256xbf16>
    %cst_14 = arith.constant dense<0.000000e+00> : vector<8x256xf32>
    %33 = tpu.matmul %30, %32, %cst_14 {dimension_numbers = #tpu.dot_dimension_numbers<[1], [0], [0], [1], [0, 0, 1, 1], [], []>} : vector<8x128xbf16>, vector<128x256xbf16>, vector<8x256xf32> -> vector<8x256xf32>
    %34 = arith.truncf %33 : vector<8x256xf32> to vector<8x256xbf16>
    %c0_15 = arith.constant 0 : index
    %c0_16 = arith.constant 0 : index
    %c0_17 = arith.constant 0 : index
    %35 = vector.load %arg5[%c0_15, %c0_16, %c0_17] : memref<1x8x256xbf16, #tpu.memory_space<vmem>>, vector<1x8x256xbf16>
    %36 = vector.shape_cast %35 : vector<1x8x256xbf16> to vector<8x256xbf16>
    %37 = vector.shape_cast %34 : vector<8x256xbf16> to vector<1x8x256xbf16>
    tpu.vector_store %arg5[%c0_15, %c0_16, %c0_17], %37 {strides = array<i32>} : memref<1x8x256xbf16, #tpu.memory_space<vmem>>, vector<1x8x256xbf16>,
    return
  }
  func.func @transform_0(%arg0: i32, %arg1: i32) -> (i32, i32) {
    %c0_i32 = arith.constant 0 : i32
    %c0_i32_0 = arith.constant 0 : i32
    return %arg1, %c0_i32 : i32, i32
  }
  func.func @transform_1(%arg0: i32, %arg1: i32) -> (i32, i32, i32) {
    %c0_i32 = arith.constant 0 : i32
    %c0_i32_0 = arith.constant 0 : i32
    %c0_i32_1 = arith.constant 0 : i32
    return %arg0, %c0_i32, %c0_i32_0 : i32, i32, i32
  }
  func.func @transform_2(%arg0: i32, %arg1: i32) -> (i32, i32, i32) {
    %c0_i32 = arith.constant 0 : i32
    %c0_i32_0 = arith.constant 0 : i32
    %c0_i32_1 = arith.constant 0 : i32
    return %arg0, %c0_i32, %c0_i32_0 : i32, i32, i32
  }
  func.func @transform_3(%arg0: i32, %arg1: i32) -> (i32, i32, i32) {
    %c0_i32 = arith.constant 0 : i32
    %c0_i32_0 = arith.constant 0 : i32
    return %arg0, %arg1, %c0_i32 : i32, i32, i32
  }
}

</mosaic_0001>

<llo_original>
// kernel: tpu_custom_call.1
$region0: #{tpu_custom_call.1}
  #allocation0 [shape = 'u32[]', space=smem, size = 0x4, offset = 0x4, fixed_abs, tag = 'smem constant byte address 0x4 - core index']
  #allocation1 [shape = 'u32[144,128]{1,0:T(1,128)}', space=vmem, size = 0x12000, scoped, tag = 'internal scratch']
  %s0 = inlined_call_operand.vmem [shape: f32[8,32], index: 0, kind: input, shape index: {}]
  %s1 = inlined_call_operand.vmem [shape: f32[3,128,32], index: 1, kind: input, shape index: {}]
  %s2 = inlined_call_operand.vmem [shape: bf16[3,128,256], index: 2, kind: input, shape index: {}]
  %s3 = inlined_call_operand.hbm [shape: bf16[3,8,256], index: 3, kind: output, shape index: {}]
  %s4 = sld [smem:[#allocation0]]
  $region45: #{tpu_custom_call.1} parent=0
    _
  %s6 = ssub.s32 1, %s4
  %s7 = scalar_select 0, %s6, %s4
  $region1: #{tpu_custom_call.1} parent=0
    #allocation2 [shape = 'u8[8192]{0}', space=vmem, size = 0x2000, scoped, tag = 'output window, operand 0']
    #allocation3 [shape = 's32[2]{0}', space=sflag, size = 0x8, scoped, tag = 'scoped memory for tpu_custom_call.1']
    %8 = vsyncpa [#allocation3], 0
    %s9 = scalar_lea.sflag [#allocation3], 1
    %10 = vsyncpa %s9, 0
    loop: start=0, step=1, limit=5
    $region2: #{tpu_custom_call.1} parent=1 // loop_pre_header
      _
    $region3: #{tpu_custom_call.1} parent=1 // loop_header
      %s12 = sphi 0, %s16
      %p13 = scmp.ge.s32.totalorder %s12, 5
      %s19 = sphi 0, %s31
      %s20 = sphi 0, %s27
      %s21 = sphi 0, %s19
      %s22 = sphi 0, %s20
      %s23 = sphi 0, %s21
      %s24 = sphi 0, %s22
      %s34 = sphi 0, %s36
      %s37 = sphi 0, %s34
      %s38 = sphi 0, %s37
      %s54 = sphi 0, %s38
      %s60 = sphi 0, %s62
      %s63 = sphi 0, %s60
      %s64 = sphi 0, %s63
      %s80 = sphi 0, %s64
      %s86 = sphi 0, %s88
      %s89 = sphi 0, %s86
      %s90 = sphi 0, %s89
      %s106 = sphi 0, %s90
      %s114 = sphi 0, %s116
      %s117 = sphi 0, %s114
      %s118 = sphi 0, %s117
      %s134 = sphi 0, %s118
    $region4: #{tpu_custom_call.1} parent=1 // loop_header_branch
      %15 = sbr.rel (%p13) target = $region8
    $region5: #{tpu_custom_call.1} parent=1 // loop_body
      %s17 = ssub.s32 %s12, 1
      %s18 = ssub.s32 %s12, 2
      %s25 = sadd.s32 1, %s20
      %p26 = scmp.ge.s32.totalorder %s25, 1
      %s27 = scalar_select %p26, 0, %s25
      %s28 = sadd.s32 1, %s19
      %s29 = scalar_select %p26, %s28, %s19
      %p30 = scmp.ge.s32.totalorder %s29, 3
      %s31 = scalar_select %p30, 0, %s29
      %s32 = ssub.s32 %s20, %s27
      %p33 = scmp.eq.s32.totalorder %s32, 0
      %s35 = sadd.s32 %s34, 1
      %s36 = scalar_select %p33, %s34, %s35
      %p39 = pneg %p33
      %p40 = scmp.eq.s32.totalorder %s12, 2
      %p41 = por %p39, %p40
      %p42 = scmp.ne.s32.totalorder %s34, %s37
      %p43 = scmp.eq.s32.totalorder %s12, 0
      %p44 = por %p42, %p43
      %p45 = scmp.ne.s32.totalorder %s34, %s37
      %p46 = scmp.eq.s32.totalorder %s17, 2
      %p47 = por %p45, %p46
      %p48 = scmp.ne.s32.totalorder %s37, %s38
      %p49 = scmp.eq.s32.totalorder %s17, 0
      %p50 = por %p48, %p49
      %p51 = scmp.ne.s32.totalorder %s37, %s38
      %p52 = scmp.eq.s32.totalorder %s18, 2
      %p53 = por %p51, %p52
      %p55 = scmp.ne.s32.totalorder %s38, %s54
      %p56 = scmp.eq.s32.totalorder %s18, 0
      %p57 = por %p55, %p56
      %s58 = ssub.s32 %s19, %s31
      %p59 = scmp.eq.s32.totalorder %s58, 0
      %s61 = sadd.s32 %s60, 1
      %s62 = scalar_select %p59, %s60, %s61
      %p65 = pneg %p59
      %p66 = scmp.eq.s32.totalorder %s12, 2
      %p67 = por %p65, %p66
      %p68 = scmp.ne.s32.totalorder %s60, %s63
      %p69 = scmp.eq.s32.totalorder %s12, 0
      %p70 = por %p68, %p69
      %p71 = scmp.ne.s32.totalorder %s60, %s63
      %p72 = scmp.eq.s32.totalorder %s17, 2
      %p73 = por %p71, %p72
      %p74 = scmp.ne.s32.totalorder %s63, %s64
      %p75 = scmp.eq.s32.totalorder %s17, 0
      %p76 = por %p74, %p75
      %p77 = scmp.ne.s32.totalorder %s63, %s64
      %p78 = scmp.eq.s32.totalorder %s18, 2
      %p79 = por %p77, %p78
      %p81 = scmp.ne.s32.totalorder %s64, %s80
      %p82 = scmp.eq.s32.totalorder %s18, 0
      %p83 = por %p81, %p82
      %s84 = ssub.s32 %s19, %s31
      %p85 = scmp.eq.s32.totalorder %s84, 0
      %s87 = sadd.s32 %s86, 1
      %s88 = scalar_select %p85, %s86, %s87
      %p91 = pneg %p85
      %p92 = scmp.eq.s32.totalorder %s12, 2
      %p93 = por %p91, %p92
      %p94 = scmp.ne.s32.totalorder %s86, %s89
      %p95 = scmp.eq.s32.totalorder %s12, 0
      %p96 = por %p94, %p95
      %p97 = scmp.ne.s32.totalorder %s86, %s89
      %p98 = scmp.eq.s32.totalorder %s17, 2
      %p99 = por %p97, %p98
      %p100 = scmp.ne.s32.totalorder %s89, %s90
      %p101 = scmp.eq.s32.totalorder %s17, 0
      %p102 = por %p100, %p101
      %p103 = scmp.ne.s32.totalorder %s89, %s90
      %p104 = scmp.eq.s32.totalorder %s18, 2
      %p105 = por %p103, %p104
      %p107 = scmp.ne.s32.totalorder %s90, %s106
      %p108 = scmp.eq.s32.totalorder %s18, 0
      %p109 = por %p107, %p108
      %s110 = ssub.s32 %s19, %s31
      %s111 = ssub.s32 %s20, %s27
      %s112 = sor.u32 %s110, %s111
      %p113 = scmp.eq.s32.totalorder %s112, 0
      %s115 = sadd.s32 %s114, 1
      %s116 = scalar_select %p113, %s114, %s115
      %p119 = pneg %p113
      %p120 = scmp.eq.s32.totalorder %s12, 2
      %p121 = por %p119, %p120
      %p122 = scmp.ne.s32.totalorder %s114, %s117
      %p123 = scmp.eq.s32.totalorder %s12, 0
      %p124 = por %p122, %p123
      %p125 = scmp.ne.s32.totalorder %s114, %s117
      %p126 = scmp.eq.s32.totalorder %s17, 2
      %p127 = por %p125, %p126
      %p128 = scmp.ne.s32.totalorder %s117, %s118
      %p129 = scmp.eq.s32.totalorder %s17, 0
      %p130 = por %p128, %p129
      %p131 = scmp.ne.s32.totalorder %s117, %s118
      %p132 = scmp.eq.s32.totalorder %s18, 2
      %p133 = por %p131, %p132
      %p135 = scmp.ne.s32.totalorder %s118, %s134
      %p136 = scmp.eq.s32.totalorder %s18, 0
      %p137 = por %p135, %p136
      %p138 = scmp.le.s32.totalorder 1, %s12
      %p139 = scmp.lt.s32.totalorder %s12, 4
      %p140 = pnand %p138, %p139
      %p141 = pneg %p140
      // Predicated region
      $region9: #{tpu_custom_call.1} parent=5 // pred_check
        _
      $region10: #{tpu_custom_call.1} parent=5 // pred_check_branch
        %143 = sbr.rel (%p140) target = $region12
      $region11: #{tpu_custom_call.1} parent=5 // pred_region
        %s144 = ssub.s32 %s12, 1
        // Predicated region
        $region13: #{tpu_custom_call.1} parent=11 // pred_check
          %p145 = pneg %p50
        $region14: #{tpu_custom_call.1} parent=11 // pred_check_branch
          %147 = sbr.rel (%p145) target = $region16
        $region15: #{tpu_custom_call.1} parent=11 // pred_region
          %p148 = scmp.lt.s32.totalorder %s22, 0
          %s149 = scalar_select %p148, %s22, 0
          %s150 = smul.addr %s149, 8
          %s151 = scalar_lea.vmem %s0, %s150
        $region16: #{tpu_custom_call.1} parent=11 // pred_fallthru
          _
        // Predicated region
        $region17: #{tpu_custom_call.1} parent=11 // pred_check
          %p152 = pneg %p76
        $region18: #{tpu_custom_call.1} parent=11 // pred_check_branch
          %154 = sbr.rel (%p152) target = $region20
        $region19: #{tpu_custom_call.1} parent=11 // pred_region
          %p155 = scmp.lt.s32.totalorder %s21, 2
          %s156 = scalar_select %p155, %s21, 2
          %s157 = smul.addr %s156, 16
          %s158 = smul.addr %s157, 8
          %s159 = scalar_lea.vmem %s1, %s158
        $region20: #{tpu_custom_call.1} parent=11 // pred_fallthru
          _
      $region12: #{tpu_custom_call.1} parent=5 // pred_fallthru
        _
      %p160 = scmp.lt.s32.totalorder %s12, 3
      // Predicated region
      $region21: #{tpu_custom_call.1} parent=5 // pred_check
        %p161 = pneg %p160
      $region22: #{tpu_custom_call.1} parent=5 // pred_check_branch
        %163 = sbr.rel (%p161) target = $region24
      $region23: #{tpu_custom_call.1} parent=5 // pred_region
        // Predicated region
        $region25: #{tpu_custom_call.1} parent=23 // pred_check
          %p164 = pneg %p96
        $region26: #{tpu_custom_call.1} parent=23 // pred_check_branch
          %166 = sbr.rel (%p164) target = $region28
        $region27: #{tpu_custom_call.1} parent=23 // pred_region
          %p167 = scmp.lt.s32.totalorder %s19, 2
          %s168 = scalar_select %p167, %s19, 2
          %s169 = smul.addr %s168, 32
          %s170 = smul.addr %s169, 4
          %s171 = scalar_lea.vmem %s2, %s170
        $region28: #{tpu_custom_call.1} parent=23 // pred_fallthru
          _
      $region24: #{tpu_custom_call.1} parent=5 // pred_fallthru
        _
      %p172 = scmp.le.s32.totalorder 1, %s12
      %p173 = scmp.lt.s32.totalorder %s12, 4
      %p174 = pnand %p172, %p173
      %p175 = pneg %p174
      // Predicated region
      $region29: #{tpu_custom_call.1} parent=5 // pred_check
        _
      $region30: #{tpu_custom_call.1} parent=5 // pred_check_branch
        %177 = sbr.rel (%p174) target = $region32
      $region31: #{tpu_custom_call.1} parent=5 // pred_region
        %s178 = ssub.s32 %s12, 1
        %p179 = scmp.lt.s32.totalorder %s22, 0
        %s180 = scalar_select %p179, %s22, 0
        %s181 = smul.addr %s180, 8
        %s182 = scalar_lea.vmem %s0, %s181
        %p183 = pneg %p50
        %p184 = pneg %p47
        %p185 = scmp.lt.s32.totalorder %s21, 2
        %s186 = scalar_select %p185, %s21, 2
        %s187 = smul.addr %s186, 16
        %s188 = smul.addr %s187, 8
        %s189 = scalar_lea.vmem %s1, %s188
        %p190 = pneg %p76
        %p191 = pneg %p73
        %p192 = scmp.lt.s32.totalorder %s21, 2
        %s193 = scalar_select %p192, %s21, 2
        %s194 = smul.addr %s193, 32
        %s195 = smul.addr %s194, 4
        %s196 = scalar_lea.vmem %s2, %s195
        %p197 = pneg %p102
        %p198 = pneg %p99
        %p199 = pneg %p130
        %p200 = pneg %p127
        %s201 = sand.u32 %s117, 1
        %s202 = scalar_lea.sflag [#allocation3], %s201
        %s203 = sand.u32 %s117, 1
        %s204 = smul.addr %s203, 8
        %s205 = scalar_lea.vmem [#allocation2], %s204
        %p206 = scmp.lt.s32.totalorder %s22, 0
        %s207 = scalar_select %p206, %s22, 0
        %s208 = smul.addr %s207, 8
        %s209 = scalar_lea.vmem %s0, %s208
        %p210 = scmp.lt.s32.totalorder %s21, 2
        %s211 = scalar_select %p210, %s21, 2
        %s212 = smul.addr %s211, 16
        %s213 = smul.addr %s212, 8
        %s214 = scalar_lea.vmem %s1, %s213
        %p215 = scmp.lt.s32.totalorder %s21, 2
        %s216 = scalar_select %p215, %s21, 2
        %s217 = smul.addr %s216, 32
        %s218 = smul.addr %s217, 4
        %s219 = scalar_lea.vmem %s2, %s218
        %v221 = vld [vmem:[%s209] sm:$0xff]
        %v222 = vld [vmem:[%s214] sm:$0xff]
        %v223 = vld [vmem:[%s214 + $0x8] sm:$0xff]
        %v224 = vld [vmem:[%s214 + $0x10] sm:$0xff]
        %v225 = vld [vmem:[%s214 + $0x18] sm:$0xff]
        %v226 = vld [vmem:[%s214 + $0x20] sm:$0xff]
        %v227 = vld [vmem:[%s214 + $0x28] sm:$0xff]
        %v228 = vld [vmem:[%s214 + $0x30] sm:$0xff]
        %v229 = vld [vmem:[%s214 + $0x38] sm:$0xff]
        %v230 = vld [vmem:[%s214 + $0x40] sm:$0xff]
        %v231 = vld [vmem:[%s214 + $0x48] sm:$0xff]
        %v232 = vld [vmem:[%s214 + $0x50] sm:$0xff]
        %v233 = vld [vmem:[%s214 + $0x58] sm:$0xff]
        %v234 = vld [vmem:[%s214 + $0x60] sm:$0xff]
        %v235 = vld [vmem:[%s214 + $0x68] sm:$0xff]
        %v236 = vld [vmem:[%s214 + $0x70] sm:$0xff]
        %v237 = vld [vmem:[%s214 + $0x78] sm:$0xff]
        %v238 = vmul.f32 %v221, %v221
        %vm239 = vcmask 261120
        %v240 = vsel %vm239, %v238, 0.0
        %241 = vadd.xlane.f32.xlu0 %v240
        %v242 = vpop.xlane.xlu0 %241
        %v243 = vmax.f32 %v242, 1e-24
        %v244 = vrsqrt.pop %v243
        %v245 = vmul.f32 %v221, %v244
        %v247 = vsel %vm239, %v245, 0
        %v250 = vsel %vm239, %v222, 0
        %v253 = vsel %vm239, %v223, 0
        %v256 = vsel %vm239, %v224, 0
        %v259 = vsel %vm239, %v225, 0
        %v262 = vsel %vm239, %v226, 0
        %v265 = vsel %vm239, %v227, 0
        %v268 = vsel %vm239, %v228, 0
        %v271 = vsel %vm239, %v229, 0
        %v274 = vsel %vm239, %v230, 0
        %v277 = vsel %vm239, %v231, 0
        %v280 = vsel %vm239, %v232, 0
        %v283 = vsel %vm239, %v233, 0
        %v286 = vsel %vm239, %v234, 0
        %v289 = vsel %vm239, %v235, 0
        %v292 = vsel %vm239, %v236, 0
        %v295 = vsel %vm239, %v237, 0
        %297 = vmatprep.subr.mxu0 0.0
        %298 = vmatpush1.xpose.msra.mxu0 %v295
        %299 = vmatprep.subr.mxu0 0.0
        %300 = vmatpush1.xpose.msra.mxu0 %v292
        %301 = vmatprep.subr.mxu0 0.0
        %302 = vmatpush1.xpose.msra.mxu0 %v289
        %303 = vmatprep.subr.mxu0 0.0
        %304 = vmatpush1.xpose.msra.mxu0 %v286
        %305 = vmatprep.subr.mxu0 0.0
        %306 = vmatpush1.xpose.msra.mxu0 %v283
        %307 = vmatprep.subr.mxu0 0.0
        %308 = vmatpush1.xpose.msra.mxu0 %v280
        %309 = vmatprep.subr.mxu0 0.0
        %310 = vmatpush1.xpose.msra.mxu0 %v277
        %311 = vmatprep.subr.mxu0 0.0
        %312 = vmatpush1.xpose.msra.mxu0 %v274
        %313 = vmatprep.subr.mxu0 0.0
        %314 = vmatpush1.xpose.msra.mxu0 %v271
        %315 = vmatprep.subr.mxu0 0.0
        %316 = vmatpush1.xpose.msra.mxu0 %v268
        %317 = vmatprep.subr.mxu0 0.0
        %318 = vmatpush1.xpose.msra.mxu0 %v265
        %319 = vmatprep.subr.mxu0 0.0
        %320 = vmatpush1.xpose.msra.mxu0 %v262
        %321 = vmatprep.subr.mxu0 0.0
        %322 = vmatpush1.xpose.msra.mxu0 %v259
        %323 = vmatprep.subr.mxu0 0.0
        %324 = vmatpush1.xpose.msra.mxu0 %v256
        %325 = vmatprep.subr.mxu0 0.0
        %326 = vmatpush1.xpose.msra.mxu0 %v253
        %327 = vmatprep.subr.mxu0 0.0
        %328 = vmatpush1.xpose.msra.mxu0 %v250
        %329 = vmatprep.subr.mxu0 0.0
        %330 = vmatpush2.xpose.msra.mxu0 0.0
        %331 = vmatprep.subr.mxu0 0.0
        %332 = vmatpush2.xpose.msra.mxu0 0.0
        %333 = vmatprep.subr.mxu0 0.0
        %334 = vmatpush2.xpose.msra.mxu0 0.0
        %335 = vmatprep.subr.mxu0 0.0
        %336 = vmatpush2.xpose.msra.mxu0 0.0
        %337 = vmatprep.subr.mxu0 0.0
        %338 = vmatpush2.xpose.msra.mxu0 0.0
        %339 = vmatprep.subr.mxu0 0.0
        %340 = vmatpush2.xpose.msra.mxu0 0.0
        %341 = vmatprep.subr.mxu0 0.0
        %342 = vmatpush2.xpose.msra.mxu0 0.0
        %343 = vmatprep.subr.mxu0 0.0
        %344 = vmatpush2.xpose.msra.mxu0 0.0
        %345 = vmatprep.subr.mxu0 0.0
        %346 = vmatpush2.xpose.msra.mxu0 0.0
        %347 = vmatprep.subr.mxu0 0.0
        %348 = vmatpush2.xpose.msra.mxu0 0.0
        %349 = vmatprep.subr.mxu0 0.0
        %350 = vmatpush2.xpose.msra.mxu0 0.0
        %351 = vmatprep.subr.mxu0 0.0
        %352 = vmatpush2.xpose.msra.mxu0 0.0
        %353 = vmatprep.subr.mxu0 0.0
        %354 = vmatpush2.xpose.msra.mxu0 0.0
        %355 = vmatprep.subr.mxu0 0.0
        %356 = vmatpush2.xpose.msra.mxu0 0.0
        %357 = vmatprep.subr.mxu0 0.0
        %358 = vmatpush2.xpose.msra.mxu0 0.0
        %359 = vmatprep.subr.mxu0 0.0
        %360 = vmatpush2.xpose.msra.mxu0 0.0
        %361 = vmatprep.mubr.f32.mxu0 0.0
        %362 = vmatmul.mubr.f32.gmra.mxu0 %v247
        %v363 = vpop.f32.mrf.mxu0
        %v364 = vadd.f32 0.0, %v363
        %v365 = vpop.f32.mrf.mxu0
        %366 = vdwg.mxu0
        %v367 = vlaneseq
        %v368 = vand.u32 %v367, 127
        %vm369 = vcmp.lt.s32.totalorder %v368, 10
        %v370 = vsel %vm369, %v364, -1e+30
        %371 = vmax.xlane.f32.xlu0 %v370
        %v372 = vpop.xlane.xlu0 %371
        %vm373 = vcmp.ge.f32.partialorder %v370, %v372
        %v374 = vsel %vm373, %v368, 1073741824
        %v375 = vand.u32 %v374, 65535
        %v376 = vshra.s32 %v374, 16
        %v377 = vcvt.s32.f32 %v375
        %v378 = vcvt.s32.f32 %v376
        %379 = vmin.xlane.f32.xlu0 %v378
        %v380 = vpop.xlane.xlu0 %379
        %vm381 = vcmp.eq.f32.partialorder %v378, %v380
        %v382 = vsel %vm381, %v377, inf
        %383 = vmin.xlane.f32.xlu0 %v382
        %v384 = vpop.xlane.xlu0 %383
        %v385 = vcvt.f32.s32 %v384
        %v386 = vcvt.f32.s32 %v380
        %v387 = vshll.u32 %v386, 16
        %v388 = vadd.s32 %v387, %v385
        %vm389 = vcmp.eq.s32.totalorder %v368, %v388
        %v390 = vsel %vm389, 1.0, 0.0
        %v391 = vpack.c.bf16 %v390, %v390
        %v392 = vld [vmem:[%s219] sm:$0xff]
        %v393 = vld [vmem:[%s219 + $0x8] sm:$0xff]
        %v394 = vld [vmem:[%s219 + $0x10] sm:$0xff]
        %v395 = vld [vmem:[%s219 + $0x18] sm:$0xff]
        %v396 = vld [vmem:[%s219 + $0x20] sm:$0xff]
        %v397 = vld [vmem:[%s219 + $0x28] sm:$0xff]
        %v398 = vld [vmem:[%s219 + $0x30] sm:$0xff]
        %v399 = vld [vmem:[%s219 + $0x38] sm:$0xff]
        %v400 = vld [vmem:[%s219 + $0x40] sm:$0xff]
        %v401 = vld [vmem:[%s219 + $0x48] sm:$0xff]
        %v402 = vld [vmem:[%s219 + $0x50] sm:$0xff]
        %v403 = vld [vmem:[%s219 + $0x58] sm:$0xff]
        %v404 = vld [vmem:[%s219 + $0x60] sm:$0xff]
        %v405 = vld [vmem:[%s219 + $0x68] sm:$0xff]
        %v406 = vld [vmem:[%s219 + $0x70] sm:$0xff]
        %v407 = vld [vmem:[%s219 + $0x78] sm:$0xff]
        %v424 = vunpack.c.l.b16 %v392
        %v425 = vunpack.c.h.b16 %v392
        %v426 = vunpack.c.l.b16 %v393
        %v427 = vunpack.c.h.b16 %v393
        %v428 = vunpack.c.l.b16 %v394
        %v429 = vunpack.c.h.b16 %v394
        %v430 = vunpack.c.l.b16 %v395
        %v431 = vunpack.c.h.b16 %v395
        %v432 = vunpack.c.l.b16 %v396
        %v433 = vunpack.c.h.b16 %v396
        %v434 = vunpack.c.l.b16 %v397
        %v435 = vunpack.c.h.b16 %v397
        %v436 = vunpack.c.l.b16 %v398
        %v437 = vunpack.c.h.b16 %v398
        %v438 = vunpack.c.l.b16 %v399
        %v439 = vunpack.c.h.b16 %v399
        %v440 = vunpack.c.l.b16 %v400
        %v441 = vunpack.c.h.b16 %v400
        %v442 = vunpack.c.l.b16 %v401
        %v443 = vunpack.c.h.b16 %v401
        %v444 = vunpack.c.l.b16 %v402
        %v445 = vunpack.c.h.b16 %v402
        %v446 = vunpack.c.l.b16 %v403
        %v447 = vunpack.c.h.b16 %v403
        %v448 = vunpack.c.l.b16 %v404
        %v449 = vunpack.c.h.b16 %v404
        %v450 = vunpack.c.l.b16 %v405
        %v451 = vunpack.c.h.b16 %v405
        %v452 = vunpack.c.l.b16 %v406
        %v453 = vunpack.c.h.b16 %v406
        %v454 = vunpack.c.l.b16 %v407
        %v455 = vunpack.c.h.b16 %v407
        %v456 = vpack.c.b16 %v426, %v424
        %v457 = vpack.c.b16 %v427, %v425
        %v458 = vpack.c.b16 %v430, %v428
        %v459 = vpack.c.b16 %v431, %v429
        %v460 = vpack.c.b16 %v434, %v432
        %v461 = vpack.c.b16 %v435, %v433
        %v462 = vpack.c.b16 %v438, %v436
        %v463 = vpack.c.b16 %v439, %v437
        %v464 = vpack.c.b16 %v442, %v440
        %v465 = vpack.c.b16 %v443, %v441
        %v466 = vpack.c.b16 %v446, %v444
        %v467 = vpack.c.b16 %v447, %v445
        %v468 = vpack.c.b16 %v450, %v448
        %v469 = vpack.c.b16 %v451, %v449
        %v470 = vpack.c.b16 %v454, %v452
        %v471 = vpack.c.b16 %v455, %v453
        %488 = vmatprep.subr.bf16.mxu0 %v471
        %489 = vmatpush1.bf16.msra.mxu0 %v470
        %490 = vmatprep.subr.bf16.mxu0 %v469
        %491 = vmatpush1.bf16.msra.mxu0 %v468
        %492 = vmatprep.subr.bf16.mxu0 %v467
        %493 = vmatpush1.bf16.msra.mxu0 %v466
        %494 = vmatprep.subr.bf16.mxu0 %v465
        %495 = vmatpush1.bf16.msra.mxu0 %v464
        %496 = vmatprep.subr.bf16.mxu0 %v463
        %497 = vmatpush1.bf16.msra.mxu0 %v462
        %498 = vmatprep.subr.bf16.mxu0 %v461
        %499 = vmatpush1.bf16.msra.mxu0 %v460
        %500 = vmatprep.subr.bf16.mxu0 %v459
        %501 = vmatpush1.bf16.msra.mxu0 %v458
        %502 = vmatprep.subr.bf16.mxu0 %v457
        %503 = vmatpush1.bf16.msra.mxu0 %v456
        %504 = vmatprep.subr.bf16.mxu0 0
        %505 = vmatpush2.bf16.msra.mxu0 0
        %506 = vmatprep.subr.bf16.mxu0 0
        %507 = vmatpush2.bf16.msra.mxu0 0
        %508 = vmatprep.subr.bf16.mxu0 0
        %509 = vmatpush2.bf16.msra.mxu0 0
        %510 = vmatprep.subr.bf16.mxu0 0
        %511 = vmatpush2.bf16.msra.mxu0 0
        %512 = vmatprep.subr.bf16.mxu0 0
        %513 = vmatpush2.bf16.msra.mxu0 0
        %514 = vmatprep.subr.bf16.mxu0 0
        %515 = vmatpush2.bf16.msra.mxu0 0
        %516 = vmatprep.subr.bf16.mxu0 0
        %517 = vmatpush2.bf16.msra.mxu0 0
        %518 = vmatprep.subr.bf16.mxu0 0
        %519 = vmatpush2.bf16.msra.mxu0 0
        %520 = vmatprep.mubr.bf16.mxu0 0
        %521 = vmatmul.mubr.bf16.gmra.mxu0 %v391
        %v522 = vpop.f32.mrf.mxu0
        %v523 = vadd.f32 0.0, %v522
        %v524 = vpop.f32.mrf.mxu0
        %v525 = vadd.f32 0.0, %v524
        %v526 = vpop.f32.mrf.mxu0
        %v527 = vpop.f32.mrf.mxu0
        %528 = vdwg.mxu0
        %v529 = vpack.c.bf16 %v523, %v523
        %v530 = vpack.c.bf16 %v525, %v525
        %v533 = vunpack.c.l.b16 %v529
        %v534 = vunpack.c.l.b16 %v530
        %v535 = vpack.c.b16 %v534, %v533
        %537 = vst [vmem:[%s205] sm:$0xff] %v535
        %s538 = sand.u32 %s117, 1
        %s539 = scalar_lea.sflag [#allocation3], %s538
        %s540 = sand.u32 %s117, 1
        %s541 = smul.addr %s540, 8
        %s542 = scalar_lea.vmem [#allocation2], %s541
        // Predicated region
        $region33: #{tpu_custom_call.1} parent=31 // pred_check
          %p543 = pneg %p127
        $region34: #{tpu_custom_call.1} parent=31 // pred_check_branch
          %545 = sbr.rel (%p543) target = $region36
        $region35: #{tpu_custom_call.1} parent=31 // pred_region
          %s547 = ssub.s32 128, 128
          %548 = vsyncadd %s539, %s547
          %s549 = smul.addr %s22, 2
          %s550 = smul.addr %s21, 2
          %s551 = sadd.s32 %s549, %s550
          %s552 = smul.addr %s551, 64
          %s553 = scalar_lea.hbm %s3, %s552
          %s555 = sshll.u32 %s542, 4
          %s556 = int_to_ptr.vmem [resolvable:$true] %s555
          %558 = dma.vmem_to_hbm [thread:$0]  %s556, 128, %s553, %s539
        $region36: #{tpu_custom_call.1} parent=31 // pred_fallthru
          _
      $region32: #{tpu_custom_call.1} parent=5 // pred_fallthru
        _
      %p559 = scmp.le.s32.totalorder 2, %s12
      // Predicated region
      $region37: #{tpu_custom_call.1} parent=5 // pred_check
        %p560 = pneg %p559
      $region38: #{tpu_custom_call.1} parent=5 // pred_check_branch
        %562 = sbr.rel (%p560) target = $region40
      $region39: #{tpu_custom_call.1} parent=5 // pred_region
        %s563 = ssub.s32 %s12, 2
        // Predicated region
        $region41: #{tpu_custom_call.1} parent=39 // pred_check
          %p564 = pneg %p133
        $region42: #{tpu_custom_call.1} parent=39 // pred_check_branch
          %566 = sbr.rel (%p564) target = $region44
        $region43: #{tpu_custom_call.1} parent=39 // pred_region
          %s567 = sand.u32 %s118, 1
          %s568 = scalar_lea.sflag [#allocation3], %s567
          %s569 = sand.u32 %s118, 1
          %s570 = smul.addr %s569, 8
          %s571 = scalar_lea.vmem [#allocation2], %s570
          %572 = dma.done %s568, 128
        $region44: #{tpu_custom_call.1} parent=39 // pred_fallthru
          _
      $region40: #{tpu_custom_call.1} parent=5 // pred_fallthru
        _
    $region6: #{tpu_custom_call.1} parent=1 // loop_footer
      %s16 = sadd.s32 1, %s12
    $region7: #{tpu_custom_call.1} parent=1 // loop_footer_branch
      %11 = sbr.rel target = $region3
    $region8: #{tpu_custom_call.1} parent=1 // loop_exit
      _
    %573 = vsyncpa [#allocation3], 1
    %s574 = scalar_lea.sflag [#allocation3], 1
    %575 = vsyncpa %s574, 1

</llo_original>
